<compile_context>
chip_gen: v6e
topology: v6e:2x2x1
jax: 0.10.0
libtpu: 0.0.40
codegen_flags: <defaults>
</compile_context>

<pallas_src>
import functools

import jax
import jax.numpy as jnp
from jax.experimental import pallas as pl
from jax.experimental.pallas import tpu as pltpu


def _bn_relu_dwconv_bn_kernel(xq_ref, p_ref, o_ref, *, C):
    # p_ref rows: 0 = BN1 scale, 1 = BN1 shift,
    #             2..10 = conv taps (k = kh*3 + kw) with BN2 scale folded in,
    #             11 = BN2 shift.  Every row is tiled over Wo -> (Wo*C,).
    s1 = p_ref[0].astype(jnp.float32)
    b1 = p_ref[1].astype(jnp.float32)

    def bn_relu(p, q):
        xv = xq_ref[:, p, q].astype(jnp.float32)       # (N, Ho, Wo*C)
        return jnp.maximum(xv * s1 + b1, 0.0)

    def w(k):                                          # (kh, kw) = divmod(k, 3)
        return p_ref[2 + k].astype(jnp.float32)        # (Wo*C,)

    def shift_down(a):   # a'[n, i, :] = a[n, i-1, :]; zero row at i == 0 (top pad)
        return jnp.concatenate([jnp.zeros_like(a[:, :1]), a[:, :-1]], axis=1)

    def shift_right(a):  # a'[..., j*C+c] = a[..., (j-1)*C+c]; zero block at j == 0 (left pad)
        return jnp.concatenate([jnp.zeros_like(a[..., :C]), a[..., :-C]], axis=-1)

    # Depthwise 3x3 / stride-2 / pad-1 conv as 9 elementwise MACs over the four
    # stride-2 phase planes of the BN1+ReLU'd input (running accumulation).
    y00 = bn_relu(0, 0)
    acc = w(4) * y00                        # (kh, kw) = (1, 1)
    y01 = bn_relu(0, 1)
    acc = acc + w(5) * y01                  # (1, 2)
    acc = acc + w(3) * shift_right(y01)     # (1, 0)
    y10 = bn_relu(1, 0)
    acc = acc + w(7) * y10                  # (2, 1)
    acc = acc + w(1) * shift_down(y10)      # (0, 1)
    y11 = bn_relu(1, 1)
    acc = acc + w(8) * y11                  # (2, 2)
    y11r = shift_right(y11)
    acc = acc + w(6) * y11r                 # (2, 0)
    acc = acc + w(2) * shift_down(y11)      # (0, 2)
    acc = acc + w(0) * shift_down(y11r)     # (0, 0)

    # Fused BN2 (eval mode) shift; BN2 scale already folded into the taps.
    o_ref[...] = (acc + p_ref[11].astype(jnp.float32)).astype(o_ref.dtype)


@jax.jit
def module_forward(x, g1, be1, m1, v1, w_conv, g2, be2, m2, v2):
    eps = 1e-5
    N, C, H, W = x.shape
    assert H % 2 == 0 and W % 2 == 0
    Ho, Wo = H // 2, W // 2
    WoC = Wo * C

    # Fold eval-mode BatchNorms into per-channel scale/shift (parameter glue).
    s1 = g1 / jnp.sqrt(v1 + eps)
    b1 = be1 - m1 * s1
    s2 = g2 / jnp.sqrt(v2 + eps)
    b2 = be2 - m2 * s2

    # Single layout transform: xq[n, p, q, i, j*C + c] = x[n, c, 2i+p, 2j+q].
    xq = jnp.transpose(x.reshape(N, C, Ho, 2, Wo, 2), (0, 3, 5, 2, 4, 1))
    xq = xq.reshape(N, 2, 2, Ho, WoC)

    # One lane-dense parameter slab: BN1 scale/shift, 9 conv taps * BN2 scale,
    # BN2 shift -- each per-channel vector tiled over the Wo output columns.
    w_taps = jnp.transpose(w_conv[:, 0, :, :] * s2[:, None, None], (1, 2, 0))
    w_taps = w_taps.reshape(9, C)
    params = jnp.concatenate(
        [jnp.tile(s1, Wo)[None], jnp.tile(b1, Wo)[None],
         jnp.tile(w_taps, (1, Wo)), jnp.tile(b2, Wo)[None]],
        axis=0)                                            # (12, Wo*C)

    out_flat = pl.pallas_call(
        functools.partial(_bn_relu_dwconv_bn_kernel, C=C),
        out_shape=jax.ShapeDtypeStruct((N, Ho, WoC), x.dtype),
        grid=(1,),   # single step: whole problem in one block, no per-batch grid
        in_specs=[pl.BlockSpec((N, 2, 2, Ho, WoC), lambda i: (0, 0, 0, 0, 0)),
                  pl.BlockSpec((12, WoC), lambda i: (0, 0))],
        out_specs=pl.BlockSpec((N, Ho, WoC), lambda i: (0, 0, 0)),
        compiler_params=pltpu.CompilerParams(
            dimension_semantics=("arbitrary",)),
    )(xq, params)

    # (N, Ho, Wo*C) -> PyTorch's NCHW convention.
    return jnp.transpose(out_flat.reshape(N, Ho, Wo, C), (0, 3, 1, 2))


def reference(x, g1, be1, m1, v1, w_conv, g2, be2, m2, v2):
    eps = 1e-5

    def bn(t, g, b, m, v):
        scale = (g / jnp.sqrt(v + eps))[None, :, None, None]
        return (t - m[None, :, None, None]) * scale + b[None, :, None, None]

    y = jnp.maximum(bn(x, g1, be1, m1, v1), 0.0)
    y = jax.lax.conv_general_dilated(
        y, w_conv, window_strides=(2, 2), padding=((1, 1), (1, 1)),
        dimension_numbers=("NCHW", "OIHW", "NCHW"),
        feature_group_count=x.shape[1])
    return bn(y, g2, be2, m2, v2)


if __name__ == "__main__":
    key = jax.random.PRNGKey(0)
    N, C, H, W = 2, 48, 16, 16   # C = 48 is fixed by the module; small spatial dims
    ks = jax.random.split(key, 10)
    x = jax.random.normal(ks[0], (N, C, H, W), jnp.float32)
    g1 = 1.0 + 0.1 * jax.random.normal(ks[1], (C,), jnp.float32)
    be1 = 0.1 * jax.random.normal(ks[2], (C,), jnp.float32)
    m1 = 0.05 * jax.random.normal(ks[3], (C,), jnp.float32)
    v1 = jax.random.uniform(ks[4], (C,), jnp.float32, minval=0.5, maxval=1.5)
    w_conv = 0.2 * jax.random.normal(ks[5], (C, 1, 3, 3), jnp.float32)
    g2 = 1.0 + 0.1 * jax.random.normal(ks[6], (C,), jnp.float32)
    be2 = 0.1 * jax.random.normal(ks[7], (C,), jnp.float32)
    m2 = 0.05 * jax.random.normal(ks[8], (C,), jnp.float32)
    v2 = jax.random.uniform(ks[9], (C,), jnp.float32, minval=0.5, maxval=1.5)

    out = module_forward(x, g1, be1, m1, v1, w_conv, g2, be2, m2, v2)
    out = jax.block_until_ready(out)

    ref = reference(x, g1, be1, m1, v1, w_conv, g2, be2, m2, v2)
    assert out.shape == (N, C, H // 2, W // 2), out.shape
    if not jnp.allclose(out, ref, atol=3e-5, rtol=3e-5):
        raise AssertionError(
            f"mismatch vs reference, max abs err = {jnp.max(jnp.abs(out - ref))}")
    print("KERNEL_OK")
</pallas_src>

<mosaic_0001>
module attributes {stable_mosaic.version = 11 : i64} {
  func.func @_bn_relu_dwconv_bn_kernel(%arg0: i32, %arg1: memref<2x2x2x8x384xf32, #tpu.memory_space<vmem>>, %arg2: memref<12x384xf32, #tpu.memory_space<vmem>>, %arg3: memref<2x8x384xf32, #tpu.memory_space<vmem>>) attributes {dimension_semantics = [#tpu.dimension_semantics<arbitrary>], iteration_bounds = array<i64: 1>, scalar_prefetch = 0 : i64, scratch_operands = 0 : i64, tpu.core_type = #tpu.core_type<tc>, window_params = [{pipeline_mode = #tpu.pipeline_mode<synchronous>, transform_indices = @transform_0, window_bounds = array<i64: 2, 2, 2, 8, 384>}, {pipeline_mode = #tpu.pipeline_mode<synchronous>, transform_indices = @transform_1, window_bounds = array<i64: 12, 384>}, {pipeline_mode = #tpu.pipeline_mode<synchronous>, transform_indices = @transform_2, window_bounds = array<i64: 2, 8, 384>}]} {
    %c0 = arith.constant 0 : index
    %c0_0 = arith.constant 0 : index
    %0 = vector.load %arg2[%c0, %c0_0] : memref<12x384xf32, #tpu.memory_space<vmem>>, vector<1x384xf32>
    %1 = vector.shape_cast %0 : vector<1x384xf32> to vector<384xf32>
    %c1 = arith.constant 1 : index
    %c0_1 = arith.constant 0 : index
    %2 = vector.load %arg2[%c1, %c0_1] : memref<12x384xf32, #tpu.memory_space<vmem>>, vector<1x384xf32>
    %3 = vector.shape_cast %2 : vector<1x384xf32> to vector<384xf32>
    %c0_2 = arith.constant 0 : index
    %c0_3 = arith.constant 0 : index
    %c0_4 = arith.constant 0 : index
    %c0_5 = arith.constant 0 : index
    %c0_6 = arith.constant 0 : index
    %4 = vector.load %arg1[%c0_2, %c0_3, %c0_4, %c0_5, %c0_6] : memref<2x2x2x8x384xf32, #tpu.memory_space<vmem>>, vector<2x1x1x8x384xf32>
    %5 = vector.shape_cast %4 : vector<2x1x1x8x384xf32> to vector<2x8x384xf32>
    %6 = vector.shape_cast %1 : vector<384xf32> to vector<1x1x384xf32>
    %7 = vector.broadcast %6 : vector<1x1x384xf32> to vector<2x8x384xf32>
    %8 = arith.mulf %5, %7 : vector<2x8x384xf32>
    %9 = vector.shape_cast %3 : vector<384xf32> to vector<1x1x384xf32>
    %10 = vector.broadcast %9 : vector<1x1x384xf32> to vector<2x8x384xf32>
    %11 = arith.addf %8, %10 : vector<2x8x384xf32>
    %cst = arith.constant 0.000000e+00 : f32
    %12 = vector.broadcast %cst : f32 to vector<2x8x384xf32>
    %13 = arith.maximumf %11, %12 : vector<2x8x384xf32>
    %c6 = arith.constant 6 : index
    %c0_7 = arith.constant 0 : index
    %14 = vector.load %arg2[%c6, %c0_7] : memref<12x384xf32, #tpu.memory_space<vmem>>, vector<1x384xf32>
    %15 = vector.shape_cast %14 : vector<1x384xf32> to vector<384xf32>
    %16 = vector.shape_cast %15 : vector<384xf32> to vector<1x1x384xf32>
    %17 = vector.broadcast %16 : vector<1x1x384xf32> to vector<2x8x384xf32>
    %18 = arith.mulf %17, %13 : vector<2x8x384xf32>
    %c0_8 = arith.constant 0 : index
    %c0_9 = arith.constant 0 : index
    %c1_10 = arith.constant 1 : index
    %c0_11 = arith.constant 0 : index
    %c0_12 = arith.constant 0 : index
    %19 = vector.load %arg1[%c0_8, %c0_9, %c1_10, %c0_11, %c0_12] : memref<2x2x2x8x384xf32, #tpu.memory_space<vmem>>, vector<2x1x1x8x384xf32>
    %20 = vector.shape_cast %19 : vector<2x1x1x8x384xf32> to vector<2x8x384xf32>
    %21 = vector.shape_cast %1 : vector<384xf32> to vector<1x1x384xf32>
    %22 = vector.broadcast %21 : vector<1x1x384xf32> to vector<2x8x384xf32>
    %23 = arith.mulf %20, %22 : vector<2x8x384xf32>
    %24 = vector.shape_cast %3 : vector<384xf32> to vector<1x1x384xf32>
    %25 = vector.broadcast %24 : vector<1x1x384xf32> to vector<2x8x384xf32>
    %26 = arith.addf %23, %25 : vector<2x8x384xf32>
    %cst_13 = arith.constant 0.000000e+00 : f32
    %27 = vector.broadcast %cst_13 : f32 to vector<2x8x384xf32>
    %28 = arith.maximumf %26, %27 : vector<2x8x384xf32>
    %c7 = arith.constant 7 : index
    %c0_14 = arith.constant 0 : index
    %29 = vector.load %arg2[%c7, %c0_14] : memref<12x384xf32, #tpu.memory_space<vmem>>, vector<1x384xf32>
    %30 = vector.shape_cast %29 : vector<1x384xf32> to vector<384xf32>
    %31 = vector.shape_cast %30 : vector<384xf32> to vector<1x1x384xf32>
    %32 = vector.broadcast %31 : vector<1x1x384xf32> to vector<2x8x384xf32>
    %33 = arith.mulf %32, %28 : vector<2x8x384xf32>
    %34 = arith.addf %18, %33 : vector<2x8x384xf32>
    %c5 = arith.constant 5 : index
    %c0_15 = arith.constant 0 : index
    %35 = vector.load %arg2[%c5, %c0_15] : memref<12x384xf32, #tpu.memory_space<vmem>>, vector<1x384xf32>
    %36 = vector.shape_cast %35 : vector<1x384xf32> to vector<384xf32>
    %cst_16 = arith.constant 0.000000e+00 : f32
    %37 = vector.broadcast %cst_16 : f32 to vector<2x8x48xf32>
    %38 = vector.extract_strided_slice %28 {offsets = [0, 0, 0], sizes = [2, 8, 336], strides = [1, 1, 1]} : vector<2x8x384xf32> to vector<2x8x336xf32>
    %39 = tpu.concatenate %37, %38 in 2 : vector<2x8x48xf32>, vector<2x8x336xf32> -> vector<2x8x384xf32>
    %40 = vector.shape_cast %36 : vector<384xf32> to vector<1x1x384xf32>
    %41 = vector.broadcast %40 : vector<1x1x384xf32> to vector<2x8x384xf32>
    %42 = arith.mulf %41, %39 : vector<2x8x384xf32>
    %43 = arith.addf %34, %42 : vector<2x8x384xf32>
    %c0_17 = arith.constant 0 : index
    %c1_18 = arith.constant 1 : index
    %c0_19 = arith.constant 0 : index
    %c0_20 = arith.constant 0 : index
    %c0_21 = arith.constant 0 : index
    %44 = vector.load %arg1[%c0_17, %c1_18, %c0_19, %c0_20, %c0_21] : memref<2x2x2x8x384xf32, #tpu.memory_space<vmem>>, vector<2x1x1x8x384xf32>
    %45 = vector.shape_cast %44 : vector<2x1x1x8x384xf32> to vector<2x8x384xf32>
    %46 = vector.shape_cast %1 : vector<384xf32> to vector<1x1x384xf32>
    %47 = vector.broadcast %46 : vector<1x1x384xf32> to vector<2x8x384xf32>
    %48 = arith.mulf %45, %47 : vector<2x8x384xf32>
    %49 = vector.shape_cast %3 : vector<384xf32> to vector<1x1x384xf32>
    %50 = vector.broadcast %49 : vector<1x1x384xf32> to vector<2x8x384xf32>
    %51 = arith.addf %48, %50 : vector<2x8x384xf32>
    %cst_22 = arith.constant 0.000000e+00 : f32
    %52 = vector.broadcast %cst_22 : f32 to vector<2x8x384xf32>
    %53 = arith.maximumf %51, %52 : vector<2x8x384xf32>
    %c9 = arith.constant 9 : index
    %c0_23 = arith.constant 0 : index
    %54 = vector.load %arg2[%c9, %c0_23] : memref<12x384xf32, #tpu.memory_space<vmem>>, vector<1x384xf32>
    %55 = vector.shape_cast %54 : vector<1x384xf32> to vector<384xf32>
    %56 = vector.shape_cast %55 : vector<384xf32> to vector<1x1x384xf32>
    %57 = vector.broadcast %56 : vector<1x1x384xf32> to vector<2x8x384xf32>
    %58 = arith.mulf %57, %53 : vector<2x8x384xf32>
    %59 = arith.addf %43, %58 : vector<2x8x384xf32>
    %c3 = arith.constant 3 : index
    %c0_24 = arith.constant 0 : index
    %60 = vector.load %arg2[%c3, %c0_24] : memref<12x384xf32, #tpu.memory_space<vmem>>, vector<1x384xf32>
    %61 = vector.shape_cast %60 : vector<1x384xf32> to vector<384xf32>
    %cst_25 = arith.constant 0.000000e+00 : f32
    %62 = vector.broadcast %cst_25 : f32 to vector<2x1x384xf32>
    %63 = vector.extract_strided_slice %53 {offsets = [0, 0, 0], sizes = [2, 7, 384], strides = [1, 1, 1]} : vector<2x8x384xf32> to vector<2x7x384xf32>
    %64 = tpu.concatenate %62, %63 in 1 : vector<2x1x384xf32>, vector<2x7x384xf32> -> vector<2x8x384xf32>
    %65 = vector.shape_cast %61 : vector<384xf32> to vector<1x1x384xf32>
    %66 = vector.broadcast %65 : vector<1x1x384xf32> to vector<2x8x384xf32>
    %67 = arith.mulf %66, %64 : vector<2x8x384xf32>
    %68 = arith.addf %59, %67 : vector<2x8x384xf32>
    %c0_26 = arith.constant 0 : index
    %c1_27 = arith.constant 1 : index
    %c1_28 = arith.constant 1 : index
    %c0_29 = arith.constant 0 : index
    %c0_30 = arith.constant 0 : index
    %69 = vector.load %arg1[%c0_26, %c1_27, %c1_28, %c0_29, %c0_30] : memref<2x2x2x8x384xf32, #tpu.memory_space<vmem>>, vector<2x1x1x8x384xf32>
    %70 = vector.shape_cast %69 : vector<2x1x1x8x384xf32> to vector<2x8x384xf32>
    %71 = vector.shape_cast %1 : vector<384xf32> to vector<1x1x384xf32>
    %72 = vector.broadcast %71 : vector<1x1x384xf32> to vector<2x8x384xf32>
    %73 = arith.mulf %70, %72 : vector<2x8x384xf32>
    %74 = vector.shape_cast %3 : vector<384xf32> to vector<1x1x384xf32>
    %75 = vector.broadcast %74 : vector<1x1x384xf32> to vector<2x8x384xf32>
    %76 = arith.addf %73, %75 : vector<2x8x384xf32>
    %cst_31 = arith.constant 0.000000e+00 : f32
    %77 = vector.broadcast %cst_31 : f32 to vector<2x8x384xf32>
    %78 = arith.maximumf %76, %77 : vector<2x8x384xf32>
    %c10 = arith.constant 10 : index
    %c0_32 = arith.constant 0 : index
    %79 = vector.load %arg2[%c10, %c0_32] : memref<12x384xf32, #tpu.memory_space<vmem>>, vector<1x384xf32>
    %80 = vector.shape_cast %79 : vector<1x384xf32> to vector<384xf32>
    %81 = vector.shape_cast %80 : vector<384xf32> to vector<1x1x384xf32>
    %82 = vector.broadcast %81 : vector<1x1x384xf32> to vector<2x8x384xf32>
    %83 = arith.mulf %82, %78 : vector<2x8x384xf32>
    %84 = arith.addf %68, %83 : vector<2x8x384xf32>
    %cst_33 = arith.constant 0.000000e+00 : f32
    %85 = vector.broadcast %cst_33 : f32 to vector<2x8x48xf32>
    %86 = vector.extract_strided_slice %78 {offsets = [0, 0, 0], sizes = [2, 8, 336], strides = [1, 1, 1]} : vector<2x8x384xf32> to vector<2x8x336xf32>
    %87 = tpu.concatenate %85, %86 in 2 : vector<2x8x48xf32>, vector<2x8x336xf32> -> vector<2x8x384xf32>
    %c8 = arith.constant 8 : index
    %c0_34 = arith.constant 0 : index
    %88 = vector.load %arg2[%c8, %c0_34] : memref<12x384xf32, #tpu.memory_space<vmem>>, vector<1x384xf32>
    %89 = vector.shape_cast %88 : vector<1x384xf32> to vector<384xf32>
    %90 = vector.shape_cast %89 : vector<384xf32> to vector<1x1x384xf32>
    %91 = vector.broadcast %90 : vector<1x1x384xf32> to vector<2x8x384xf32>
    %92 = arith.mulf %91, %87 : vector<2x8x384xf32>
    %93 = arith.addf %84, %92 : vector<2x8x384xf32>
    %c4 = arith.constant 4 : index
    %c0_35 = arith.constant 0 : index
    %94 = vector.load %arg2[%c4, %c0_35] : memref<12x384xf32, #tpu.memory_space<vmem>>, vector<1x384xf32>
    %95 = vector.shape_cast %94 : vector<1x384xf32> to vector<384xf32>
    %cst_36 = arith.constant 0.000000e+00 : f32
    %96 = vector.broadcast %cst_36 : f32 to vector<2x1x384xf32>
    %97 = vector.extract_strided_slice %78 {offsets = [0, 0, 0], sizes = [2, 7, 384], strides = [1, 1, 1]} : vector<2x8x384xf32> to vector<2x7x384xf32>
    %98 = tpu.concatenate %96, %97 in 1 : vector<2x1x384xf32>, vector<2x7x384xf32> -> vector<2x8x384xf32>
    %99 = vector.shape_cast %95 : vector<384xf32> to vector<1x1x384xf32>
    %100 = vector.broadcast %99 : vector<1x1x384xf32> to vector<2x8x384xf32>
    %101 = arith.mulf %100, %98 : vector<2x8x384xf32>
    %102 = arith.addf %93, %101 : vector<2x8x384xf32>
    %c2 = arith.constant 2 : index
    %c0_37 = arith.constant 0 : index
    %103 = vector.load %arg2[%c2, %c0_37] : memref<12x384xf32, #tpu.memory_space<vmem>>, vector<1x384xf32>
    %104 = vector.shape_cast %103 : vector<1x384xf32> to vector<384xf32>
    %cst_38 = arith.constant 0.000000e+00 : f32
    %105 = vector.broadcast %cst_38 : f32 to vector<2x1x384xf32>
    %106 = vector.extract_strided_slice %87 {offsets = [0, 0, 0], sizes = [2, 7, 384], strides = [1, 1, 1]} : vector<2x8x384xf32> to vector<2x7x384xf32>
    %107 = tpu.concatenate %105, %106 in 1 : vector<2x1x384xf32>, vector<2x7x384xf32> -> vector<2x8x384xf32>
    %108 = vector.shape_cast %104 : vector<384xf32> to vector<1x1x384xf32>
    %109 = vector.broadcast %108 : vector<1x1x384xf32> to vector<2x8x384xf32>
    %110 = arith.mulf %109, %107 : vector<2x8x384xf32>
    %111 = arith.addf %102, %110 : vector<2x8x384xf32>
    %c11 = arith.constant 11 : index
    %c0_39 = arith.constant 0 : index
    %112 = vector.load %arg2[%c11, %c0_39] : memref<12x384xf32, #tpu.memory_space<vmem>>, vector<1x384xf32>
    %113 = vector.shape_cast %112 : vector<1x384xf32> to vector<384xf32>
    %114 = vector.shape_cast %113 : vector<384xf32> to vector<1x1x384xf32>
    %115 = vector.broadcast %114 : vector<1x1x384xf32> to vector<2x8x384xf32>
    %116 = arith.addf %111, %115 : vector<2x8x384xf32>
    %c0_40 = arith.constant 0 : index
    %c0_41 = arith.constant 0 : index
    %c0_42 = arith.constant 0 : index
    %117 = vector.load %arg3[%c0_40, %c0_41, %c0_42] : memref<2x8x384xf32, #tpu.memory_space<vmem>>, vector<2x8x384xf32>
    tpu.vector_store %arg3[%c0_40, %c0_41, %c0_42], %116 {strides = array<i32>} : memref<2x8x384xf32, #tpu.memory_space<vmem>>, vector<2x8x384xf32>,
    return
  }
  func.func @transform_0(%arg0: i32) -> (i32, i32, i32, i32, i32) {
    %c0_i32 = arith.constant 0 : i32
    %c0_i32_0 = arith.constant 0 : i32
    %c0_i32_1 = arith.constant 0 : i32
    %c0_i32_2 = arith.constant 0 : i32
    %c0_i32_3 = arith.constant 0 : i32
    %c0_i32_4 = arith.constant 0 : i32
    return %c0_i32, %c0_i32_0, %c0_i32_1, %c0_i32_2, %c0_i32_3 : i32, i32, i32, i32, i32
  }
  func.func @transform_1(%arg0: i32) -> (i32, i32) {
    %c0_i32 = arith.constant 0 : i32
    %c0_i32_0 = arith.constant 0 : i32
    %c0_i32_1 = arith.constant 0 : i32
    return %c0_i32, %c0_i32_0 : i32, i32
  }
  func.func @transform_2(%arg0: i32) -> (i32, i32, i32) {
    %c0_i32 = arith.constant 0 : i32
    %c0_i32_0 = arith.constant 0 : i32
    %c0_i32_1 = arith.constant 0 : i32
    %c0_i32_2 = arith.constant 0 : i32
    return %c0_i32, %c0_i32_0, %c0_i32_1 : i32, i32, i32
  }
}

</mosaic_0001>

<llo_original>
// kernel: tile.36
$region0: #{tile.36}
  #allocation0 [shape = 's32[1]{0}', space=sflag, size = 0x4, scoped, tag = 'scoped memory for tile.36']
  %s0 = inlined_call_operand.vmem [shape: f32[48], index: 0, kind: input, shape index: {}]
  %s1 = inlined_call_operand.vmem [shape: f32[8,48], index: 1, kind: output, shape index: {}]
  // Predicated region
  $region2: #{tile.36} parent=0 // pred_check
    _
  $region3: #{tile.36} parent=0 // pred_check_branch
    %3 = sbr.rel (0) target = $region5
  $region4: #{tile.36} parent=0 // pred_region
    _
  $region5: #{tile.36} parent=0 // pred_fallthru
    _
  %v4 = vld [vmem:[%s0] ss:$0 sm:$0xff]
  %5 = vst [vmem:[%s1] sm:$0xff] %v4

// kernel: tile.37
$region0: #{tile.37}
  %s0 = inlined_call_operand.vmem [shape: f32[8,48], index: 0, kind: input, shape index: {}]
  %s1 = inlined_call_operand.vmem [shape: f32[1,384], index: 1, kind: output, shape index: {}]
  $region1: #{tile.37} parent=0
    #allocation0 [shape = 'u8[12288]{0}', space=vmem, size = 0x3000, scoped, tag = 'scoped mem for output reshape']
    %v2 = vld [vmem:[%s0] sm:$0x1]
    %vm3 = vcmask 392192
    %4 = vst.msk [vmem:[#allocation0] sm:$0x1] %vm3, %v2
    %s5 = scalar_lea.vmem %s0, 5
    %v6 = vld [vmem:[%s5] sm:$0x1]
    %s7 = scalar_lea.vmem %s0, 5
    %v8 = vld [vmem:[%s7] sm:$0x1]
    %vm9 = vcmask 130048
    %v10 = vsel %vm9, %v8, %v6
    %11 = vrot.lane.b32.xlu0 %v10, 112
    %v12 = vpop.permute.xlu0 %11
    %vm13 = vcmask 261120
    %s14 = scalar_lea.vmem [#allocation0], 16
    %15 = vst.msk [vmem:[%s14] sm:$0x1] %vm13, %v12
    %vm16 = vcmask 1048448
    %s17 = scalar_lea.vmem [#allocation0], 8
    %18 = vst.msk [vmem:[%s17] sm:$0x1] %vm16, %v12
    %s19 = scalar_lea.vmem %s0, 2
    %v20 = vld [vmem:[%s19] sm:$0x1]
    %s21 = scalar_lea.vmem %s0, 2
    %v22 = vld [vmem:[%s21] sm:$0x1]
    %vm23 = vcmask 261120
    %v24 = vsel %vm23, %v22, %v20
    %25 = vrot.lane.b32.xlu0 %v24, 96
    %v26 = vpop.permute.xlu0 %25
    %vm27 = vcmask 130048
    %s28 = scalar_lea.vmem [#allocation0], 8
    %29 = vst.msk [vmem:[%s28] sm:$0x1] %vm27, %v26
    %vm30 = vcmask 1048320
    %31 = vst.msk [vmem:[#allocation0] sm:$0x1] %vm30, %v26
    %s32 = scalar_lea.vmem %s0, 7
    %v33 = vld [vmem:[%s32] sm:$0x1]
    %34 = vrot.lane.b32.xlu0 %v33, 80
    %v35 = vpop.permute.xlu0 %34
    %vm36 = vcmask 1048192
    %s37 = scalar_lea.vmem [#allocation0], 16
    %38 = vst.msk [vmem:[%s37] sm:$0x1] %vm36, %v35
    %s39 = scalar_lea.vmem %s0, 4
    %v40 = vld [vmem:[%s39] sm:$0x1]
    %41 = vrot.lane.b32.xlu0 %v40, 64
    %v42 = vpop.permute.xlu0 %41
    %vm43 = vcmask 916992
    %s44 = scalar_lea.vmem [#allocation0], 8
    %45 = vst.msk [vmem:[%s44] sm:$0x1] %vm43, %v42
    %s46 = scalar_lea.vmem %s0, 1
    %v47 = vld [vmem:[%s46] sm:$0x1]
    %48 = vrot.lane.b32.xlu0 %v47, 48
    %v49 = vpop.permute.xlu0 %48
    %vm50 = vcmask 785792
    %51 = vst.msk [vmem:[#allocation0] sm:$0x1] %vm50, %v49
    %s52 = scalar_lea.vmem %s0, 6
    %v53 = vld [vmem:[%s52] sm:$0x1]
    %54 = vrot.lane.b32.xlu0 %v53, 32
    %v55 = vpop.permute.xlu0 %54
    %vm56 = vcmask 654592
    %s57 = scalar_lea.vmem [#allocation0], 16
    %58 = vst.msk [vmem:[%s57] sm:$0x1] %vm56, %v55
    %s59 = scalar_lea.vmem %s0, 3
    %v60 = vld [vmem:[%s59] sm:$0x1]
    %61 = vrot.lane.b32.xlu0 %v60, 16
    %v62 = vpop.permute.xlu0 %61
    %vm63 = vcmask 523392
    %s64 = scalar_lea.vmem [#allocation0], 8
    %65 = vst.msk [vmem:[%s64] sm:$0x1] %vm63, %v62
    %s67 = sshll.u32 1, 1
    %s68 = ssub.s32 %s67, 1
    %v70 = vld [vmem:[#allocation0] sm:%s68]
    %s71 = sshll.u32 1, 1
    %s72 = ssub.s32 %s71, 1
    %73 = vst [vmem:[%s1] sm:%s72] %v70
    %s74 = scalar_lea.vmem [#allocation0], 8
    %v75 = vld [vmem:[%s74] sm:%s68]
    %s76 = sshll.u32 1, 1
    %s77 = ssub.s32 %s76, 1
    %s78 = scalar_lea.vmem %s1, 1
    %79 = vst [vmem:[%s78] sm:%s77] %v75
    %s80 = scalar_lea.vmem [#allocation0], 16
    %v81 = vld [vmem:[%s80] sm:%s68]
    %s82 = sshll.u32 1, 1
    %s83 = ssub.s32 %s82, 1
    %s84 = smul.addr 1, 2
    %s85 = scalar_lea.vmem %s1, %s84
    %86 = vst [vmem:[%s85] sm:%s83] %v81

// kernel: tile.32
$region0: #{tile.32}
  %s0 = inlined_call_operand.vmem [shape: f32[9,8,48], index: 0, kind: input, shape index: {}]
  %s1 = inlined_call_operand.vmem [shape: f32[9,384], index: 1, kind: output, shape index: {}]
  %v2 = vld [vmem:[%s0] ss:$8 sm:$0xf]
  %v3 = vld [vmem:[%s0] ss:$8 sm:$0xf0]
  %vm4 = vcmask 1047556
  %v5 = vsel %vm4, %v3, %v2
  %vm6 = vcmask 392192
  %7 = vst.msk [vmem:[%s1] sm:$0xff] %vm6, %v5
  %s8 = scalar_lea.vmem %s0, 64
  %v9 = vld [vmem:[%s8] sm:$0x1]
  %vm10 = vcmask 392192
  %s11 = scalar_lea.vmem %s1, 24
  %12 = vst.msk [vmem:[%s11] sm:$0x1] %vm10, %v9
  %s13 = scalar_lea.vmem %s0, 69
  %v14 = vld [vmem:[%s13] sm:$0x1]
  %s15 = scalar_lea.vmem %s0, 4294967293
  %v16 = vld [vmem:[%s15] ss:$8 sm:$0x1e]
  %vm17 = vcmask 1044481
  %v18 = vsel %vm17, %v16, %v14
  %s19 = scalar_lea.vmem %s0, 4294967293
  %v20 = vld [vmem:[%s19] ss:$8 sm:$0xe0]
  %vm21 = vcmask 1047557
  %v22 = vsel %vm21, %v20, %v18
  %s23 = scalar_lea.vmem %s0, 69
  %v24 = vld [vmem:[%s23] sm:$0x1]
  %s25 = scalar_lea.vmem %s0, 4294967293
  %v26 = vld [vmem:[%s25] ss:$8 sm:$0x1e]
  %vm27 = vcmask 1044481
  %v28 = vsel %vm27, %v26, %v24
  %s29 = scalar_lea.vmem %s0, 4294967293
  %v30 = vld [vmem:[%s29] ss:$8 sm:$0xe0]
  %vm31 = vcmask 1047557
  %v32 = vsel %vm31, %v30, %v28
  %vm33 = vcmask 130048
  %v34 = vsel %vm33, %v32, %v22
  %35 = vrot.lane.b32.xlu0 %v34, 112
  %v36 = vpop.permute.xlu0 %35
  %vm37 = vcmask 261120
  %s38 = scalar_lea.vmem %s1, 40
  %39 = vst.msk [vmem:[%s38] ss:$-24 sm:$0x3] %vm37, %v36
  %s40 = scalar_lea.vmem %s1, 15
  %41 = vst.msk [vmem:[%s40] sm:$0xfc] %vm37, %v36
  %vm42 = vcmask 1048448
  %s43 = scalar_lea.vmem %s1, 32
  %44 = vst.msk [vmem:[%s43] ss:$-24 sm:$0x3] %vm42, %v36
  %s45 = scalar_lea.vmem %s1, 7
  %46 = vst.msk [vmem:[%s45] sm:$0xfc] %vm42, %v36
  %s47 = scalar_lea.vmem %s0, 61
  %v48 = vld [vmem:[%s47] sm:$0x1]
  %s49 = scalar_lea.vmem %s0, 61
  %v50 = vld [vmem:[%s49] sm:$0x1]
  %vm51 = vcmask 130048
  %v52 = vsel %vm51, %v50, %v48
  %53 = vrot.lane.b32.xlu0 %v52, 112
  %v54 = vpop.permute.xlu0 %53
  %vm55 = vcmask 261120
  %s56 = scalar_lea.vmem %s1, 23
  %57 = vst.msk [vmem:[%s56] sm:$0x1] %vm55, %v54
  %vm58 = vcmask 1048448
  %s59 = scalar_lea.vmem %s1, 15
  %60 = vst.msk [vmem:[%s59] sm:$0x1] %vm58, %v54
  %s61 = scalar_lea.vmem %s0, 66
  %v62 = vld [vmem:[%s61] sm:$0x1]
  %s63 = scalar_lea.vmem %s0, 4294967290
  %v64 = vld [vmem:[%s63] ss:$8 sm:$0x1e]
  %vm65 = vcmask 1044481
  %v66 = vsel %vm65, %v64, %v62
  %s67 = scalar_lea.vmem %s0, 4294967290
  %v68 = vld [vmem:[%s67] ss:$8 sm:$0xe0]
  %vm69 = vcmask 1047557
  %v70 = vsel %vm69, %v68, %v66
  %s71 = scalar_lea.vmem %s0, 2
  %v72 = vld [vmem:[%s71] ss:$8 sm:$0xf]
  %s73 = scalar_lea.vmem %s0, 2
  %v74 = vld [vmem:[%s73] ss:$8 sm:$0xf0]
  %vm75 = vcmask 1047556
  %v76 = vsel %vm75, %v74, %v72
  %vm77 = vcmask 261120
  %v78 = vsel %vm77, %v76, %v70
  %79 = vrot.lane.b32.xlu0 %v78, 96
  %v80 = vpop.permute.xlu0 %79
  %vm81 = vcmask 130048
  %s82 = scalar_lea.vmem %s1, 32
  %83 = vst.msk [vmem:[%s82] ss:$-24 sm:$0x3] %vm81, %v80
  %s84 = scalar_lea.vmem %s1, 7
  %85 = vst.msk [vmem:[%s84] sm:$0xfc] %vm81, %v80
  %vm86 = vcmask 1048320
  %87 = vst.msk [vmem:[%s1] sm:$0xff] %vm86, %v80
  %s88 = scalar_lea.vmem %s0, 58
  %v89 = vld [vmem:[%s88] sm:$0x1]
  %s90 = scalar_lea.vmem %s0, 66
  %v91 = vld [vmem:[%s90] sm:$0x1]
  %vm92 = vcmask 261120
  %v93 = vsel %vm92, %v91, %v89
  %94 = vrot.lane.b32.xlu0 %v93, 96
  %v95 = vpop.permute.xlu0 %94
  %vm96 = vcmask 130048
  %s97 = scalar_lea.vmem %s1, 15
  %98 = vst.msk [vmem:[%s97] sm:$0x1] %vm96, %v95
  %vm99 = vcmask 1048320
  %s100 = scalar_lea.vmem %s1, 24
  %101 = vst.msk [vmem:[%s100] sm:$0x1] %vm99, %v95
  %s102 = scalar_lea.vmem %s0, 71
  %v103 = vld [vmem:[%s102] sm:$0x1]
  %s104 = scalar_lea.vmem %s0, 4294967295
  %v105 = vld [vmem:[%s104] ss:$8 sm:$0x1e]
  %vm106 = vcmask 1044481
  %v107 = vsel %vm106, %v105, %v103
  %s108 = scalar_lea.vmem %s0, 4294967295
  %v109 = vld [vmem:[%s108] ss:$8 sm:$0xe0]
  %vm110 = vcmask 1047557
  %v111 = vsel %vm110, %v109, %v107
  %112 = vrot.lane.b32.xlu0 %v111, 80
  %v113 = vpop.permute.xlu0 %112
  %vm114 = vcmask 1048192
  %s115 = scalar_lea.vmem %s1, 40
  %116 = vst.msk [vmem:[%s115] ss:$-24 sm:$0x3] %vm114, %v113
  %s117 = scalar_lea.vmem %s1, 15
  %118 = vst.msk [vmem:[%s117] sm:$0xfc] %vm114, %v113
  %s119 = scalar_lea.vmem %s0, 63
  %v120 = vld [vmem:[%s119] sm:$0x1]
  %121 = vrot.lane.b32.xlu0 %v120, 80
  %v122 = vpop.permute.xlu0 %121
  %vm123 = vcmask 1048192
  %s124 = scalar_lea.vmem %s1, 23
  %125 = vst.msk [vmem:[%s124] sm:$0x1] %vm123, %v122
  %s126 = scalar_lea.vmem %s0, 68
  %v127 = vld [vmem:[%s126] sm:$0x1]
  %s128 = scalar_lea.vmem %s0, 4294967292
  %v129 = vld [vmem:[%s128] ss:$8 sm:$0x1e]
  %vm130 = vcmask 1044481
  %v131 = vsel %vm130, %v129, %v127
  %s132 = scalar_lea.vmem %s0, 4294967292
  %v133 = vld [vmem:[%s132] ss:$8 sm:$0xe0]
  %vm134 = vcmask 1047557
  %v135 = vsel %vm134, %v133, %v131
  %136 = vrot.lane.b32.xlu0 %v135, 64
  %v137 = vpop.permute.xlu0 %136
  %vm138 = vcmask 916992
  %s139 = scalar_lea.vmem %s1, 32
  %140 = vst.msk [vmem:[%s139] ss:$-24 sm:$0x3] %vm138, %v137
  %s141 = scalar_lea.vmem %s1, 7
  %142 = vst.msk [vmem:[%s141] sm:$0xfc] %vm138, %v137
  %s143 = scalar_lea.vmem %s0, 60
  %v144 = vld [vmem:[%s143] sm:$0x1]
  %145 = vrot.lane.b32.xlu0 %v144, 64
  %v146 = vpop.permute.xlu0 %145
  %vm147 = vcmask 916992
  %s148 = scalar_lea.vmem %s1, 15
  %149 = vst.msk [vmem:[%s148] sm:$0x1] %vm147, %v146
  %s150 = scalar_lea.vmem %s0, 1
  %v151 = vld [vmem:[%s150] ss:$8 sm:$0xf]
  %s152 = scalar_lea.vmem %s0, 1
  %v153 = vld [vmem:[%s152] ss:$8 sm:$0xf0]
  %vm154 = vcmask 1047556
  %v155 = vsel %vm154, %v153, %v151
  %156 = vrot.lane.b32.xlu0 %v155, 48
  %v157 = vpop.permute.xlu0 %156
  %vm158 = vcmask 785792
  %159 = vst.msk [vmem:[%s1] sm:$0xff] %vm158, %v157
  %s160 = scalar_lea.vmem %s0, 65
  %v161 = vld [vmem:[%s160] sm:$0x1]
  %162 = vrot.lane.b32.xlu0 %v161, 48
  %v163 = vpop.permute.xlu0 %162
  %vm164 = vcmask 785792
  %s165 = scalar_lea.vmem %s1, 24
  %166 = vst.msk [vmem:[%s165] sm:$0x1] %vm164, %v163
  %s167 = scalar_lea.vmem %s0, 70
  %v168 = vld [vmem:[%s167] sm:$0x1]
  %s169 = scalar_lea.vmem %s0, 4294967294
  %v170 = vld [vmem:[%s169] ss:$8 sm:$0x1e]
  %vm171 = vcmask 1044481
  %v172 = vsel %vm171, %v170, %v168
  %s173 = scalar_lea.vmem %s0, 4294967294
  %v174 = vld [vmem:[%s173] ss:$8 sm:$0xe0]
  %vm175 = vcmask 1047557
  %v176 = vsel %vm175, %v174, %v172
  %177 = vrot.lane.b32.xlu0 %v176, 32
  %v178 = vpop.permute.xlu0 %177
  %vm179 = vcmask 654592
  %s180 = scalar_lea.vmem %s1, 40
  %181 = vst.msk [vmem:[%s180] ss:$-24 sm:$0x3] %vm179, %v178
  %s182 = scalar_lea.vmem %s1, 15
  %183 = vst.msk [vmem:[%s182] sm:$0xfc] %vm179, %v178
  %s184 = scalar_lea.vmem %s0, 62
  %v185 = vld [vmem:[%s184] sm:$0x1]
  %186 = vrot.lane.b32.xlu0 %v185, 32
  %v187 = vpop.permute.xlu0 %186
  %vm188 = vcmask 654592
  %s189 = scalar_lea.vmem %s1, 23
  %190 = vst.msk [vmem:[%s189] sm:$0x1] %vm188, %v187
  %s191 = scalar_lea.vmem %s0, 67
  %v192 = vld [vmem:[%s191] sm:$0x1]
  %s193 = scalar_lea.vmem %s0, 4294967291
  %v194 = vld [vmem:[%s193] ss:$8 sm:$0x1e]
  %vm195 = vcmask 1044481
  %v196 = vsel %vm195, %v194, %v192
  %s197 = scalar_lea.vmem %s0, 4294967291
  %v198 = vld [vmem:[%s197] ss:$8 sm:$0xe0]
  %vm199 = vcmask 1047557
  %v200 = vsel %vm199, %v198, %v196
  %201 = vrot.lane.b32.xlu0 %v200, 16
  %v202 = vpop.permute.xlu0 %201
  %vm203 = vcmask 523392
  %s204 = scalar_lea.vmem %s1, 32
  %205 = vst.msk [vmem:[%s204] ss:$-24 sm:$0x3] %vm203, %v202
  %s206 = scalar_lea.vmem %s1, 7
  %207 = vst.msk [vmem:[%s206] sm:$0xfc] %vm203, %v202
  %s208 = scalar_lea.vmem %s0, 59
  %v209 = vld [vmem:[%s208] sm:$0x1]
  %210 = vrot.lane.b32.xlu0 %v209, 16
  %v211 = vpop.permute.xlu0 %210
  %vm212 = vcmask 523392
  %s213 = scalar_lea.vmem %s1, 15
  %214 = vst.msk [vmem:[%s213] sm:$0x1] %vm212, %v211

// kernel: module_forward.1
$region0: #{module_forward.1}
  #allocation0 [shape = 'u32[]', space=smem, size = 0x4, offset = 0x4, fixed_abs, tag = 'smem constant byte address 0x4 - core index']
  #allocation1 [shape = 'u32[144,128]{1,0:T(1,128)}', space=vmem, size = 0x12000, scoped, tag = 'internal scratch']
  %s0 = inlined_call_operand.vmem [shape: f32[2,2,2,8,384], index: 0, kind: input, shape index: {}]
  %s1 = inlined_call_operand.vmem [shape: f32[12,384], index: 1, kind: input, shape index: {}]
  %s2 = inlined_call_operand.vmem [shape: f32[2,8,384], index: 2, kind: output, shape index: {}]
  %s3 = sld [smem:[#allocation0]]
  $region18: #{module_forward.1} parent=0
    _
  %s5 = ssub.s32 1, %s3
  %s6 = scalar_select 0, %s5, %s3
  // Predicated region
  $region2: #{module_forward.1} parent=0 // pred_check
    _
  $region3: #{module_forward.1} parent=0 // pred_check_branch
    %8 = sbr.rel (0) target = $region5
  $region4: #{module_forward.1} parent=0 // pred_region
    _
  $region5: #{module_forward.1} parent=0 // pred_fallthru
    _
  // Predicated region
  $region6: #{module_forward.1} parent=0 // pred_check
    _
  $region7: #{module_forward.1} parent=0 // pred_check_branch
    %10 = sbr.rel (0) target = $region9
  $region8: #{module_forward.1} parent=0 // pred_region
    _
  $region9: #{module_forward.1} parent=0 // pred_fallthru
    _
  %v11 = vld [vmem:[%s1] ss:$8 sm:$0x7]
  %s12 = scalar_lea.vmem %s1, 1
  %v13 = vld [vmem:[%s12] ss:$8 sm:$0x7]
  %v14 = vld [vmem:[%s0] sm:$0xff]
  %v15 = vld [vmem:[%s0 + $0x8] sm:$0xff]
  %v16 = vld [vmem:[%s0 + $0x10] sm:$0xff]
  %v17 = vld [vmem:[%s0 + $0x60] sm:$0xff]
  %v18 = vld [vmem:[%s0 + $0x68] sm:$0xff]
  %v19 = vld [vmem:[%s0 + $0x70] sm:$0xff]
  %v21 = vlaneseq
  %v22 = vshrl.u32 %v21, 7
  %v23 = vsub.s32 0, %v22
  %v24 = vrot.slane %v11, %v23
  %v25 = vlaneseq
  %v26 = vshrl.u32 %v25, 7
  %v27 = vsub.s32 1, %v26
  %v28 = vrot.slane %v11, %v27
  %v29 = vlaneseq
  %v30 = vshrl.u32 %v29, 7
  %v31 = vsub.s32 2, %v30
  %v32 = vrot.slane %v11, %v31
  %v36 = vmul.f32 %v14, %v24
  %v37 = vmul.f32 %v15, %v28
  %v38 = vmul.f32 %v16, %v32
  %v39 = vmul.f32 %v17, %v24
  %v40 = vmul.f32 %v18, %v28
  %v41 = vmul.f32 %v19, %v32
  %v43 = vlaneseq
  %v44 = vshrl.u32 %v43, 7
  %v45 = vsub.s32 0, %v44
  %v46 = vrot.slane %v13, %v45
  %v47 = vlaneseq
  %v48 = vshrl.u32 %v47, 7
  %v49 = vsub.s32 1, %v48
  %v50 = vrot.slane %v13, %v49
  %v51 = vlaneseq
  %v52 = vshrl.u32 %v51, 7
  %v53 = vsub.s32 2, %v52
  %v54 = vrot.slane %v13, %v53
  %v58 = vadd.f32 %v36, %v46
  %v59 = vadd.f32 %v37, %v50
  %v60 = vadd.f32 %v38, %v54
  %v61 = vadd.f32 %v39, %v46
  %v62 = vadd.f32 %v40, %v50
  %v63 = vadd.f32 %v41, %v54
  %v64 = vmax.f32 %v58, 0.0
  %v65 = vmax.f32 %v59, 0.0
  %v66 = vmax.f32 %v60, 0.0
  %v67 = vmax.f32 %v61, 0.0
  %v68 = vmax.f32 %v62, 0.0
  %v69 = vmax.f32 %v63, 0.0
  %s70 = scalar_lea.vmem %s1, 6
  %v71 = vld [vmem:[%s70] ss:$8 sm:$0x7]
  %v73 = vlaneseq
  %v74 = vshrl.u32 %v73, 7
  %v75 = vsub.s32 0, %v74
  %v76 = vrot.slane %v71, %v75
  %v77 = vlaneseq
  %v78 = vshrl.u32 %v77, 7
  %v79 = vsub.s32 1, %v78
  %v80 = vrot.slane %v71, %v79
  %v81 = vlaneseq
  %v82 = vshrl.u32 %v81, 7
  %v83 = vsub.s32 2, %v82
  %v84 = vrot.slane %v71, %v83
  %v88 = vmul.f32 %v76, %v64
  %v89 = vmul.f32 %v80, %v65
  %v90 = vmul.f32 %v84, %v66
  %v91 = vmul.f32 %v76, %v67
  %v92 = vmul.f32 %v80, %v68
  %v93 = vmul.f32 %v84, %v69
  %s94 = scalar_lea.vmem %s0, 24
  %v95 = vld [vmem:[%s94] sm:$0xff]
  %v96 = vld [vmem:[%s94 + $0x8] sm:$0xff]
  %v97 = vld [vmem:[%s94 + $0x10] sm:$0xff]
  %v98 = vld [vmem:[%s94 + $0x60] sm:$0xff]
  %v99 = vld [vmem:[%s94 + $0x68] sm:$0xff]
  %v100 = vld [vmem:[%s94 + $0x70] sm:$0xff]
  %v101 = vmul.f32 %v95, %v24
  %v102 = vmul.f32 %v96, %v28
  %v103 = vmul.f32 %v97, %v32
  %v104 = vmul.f32 %v98, %v24
  %v105 = vmul.f32 %v99, %v28
  %v106 = vmul.f32 %v100, %v32
  %v107 = vadd.f32 %v101, %v46
  %v108 = vadd.f32 %v102, %v50
  %v109 = vadd.f32 %v103, %v54
  %v110 = vadd.f32 %v104, %v46
  %v111 = vadd.f32 %v105, %v50
  %v112 = vadd.f32 %v106, %v54
  %v113 = vmax.f32 %v107, 0.0
  %v114 = vmax.f32 %v108, 0.0
  %v115 = vmax.f32 %v109, 0.0
  %v116 = vmax.f32 %v110, 0.0
  %v117 = vmax.f32 %v111, 0.0
  %v118 = vmax.f32 %v112, 0.0
  %s119 = scalar_lea.vmem %s1, 7
  %v120 = vld [vmem:[%s119] ss:$8 sm:$0x7]
  %v122 = vlaneseq
  %v123 = vshrl.u32 %v122, 7
  %v124 = vsub.s32 0, %v123
  %v125 = vrot.slane %v120, %v124
  %v126 = vlaneseq
  %v127 = vshrl.u32 %v126, 7
  %v128 = vsub.s32 1, %v127
  %v129 = vrot.slane %v120, %v128
  %v130 = vlaneseq
  %v131 = vshrl.u32 %v130, 7
  %v132 = vsub.s32 2, %v131
  %v133 = vrot.slane %v120, %v132
  %v137 = vmul.f32 %v125, %v113
  %v138 = vmul.f32 %v129, %v114
  %v139 = vmul.f32 %v133, %v115
  %v140 = vmul.f32 %v125, %v116
  %v141 = vmul.f32 %v129, %v117
  %v142 = vmul.f32 %v133, %v118
  %v143 = vadd.f32 %v88, %v137
  %v144 = vadd.f32 %v89, %v138
  %v145 = vadd.f32 %v90, %v139
  %v146 = vadd.f32 %v91, %v140
  %v147 = vadd.f32 %v92, %v141
  %v148 = vadd.f32 %v93, %v142
  %s149 = scalar_lea.vmem %s1, 5
  %v150 = vld [vmem:[%s149] ss:$8 sm:$0x7]
  %157 = vrot.lane.b32.xlu0 %v113, 48
  %v158 = vpop.permute.xlu0 %157
  %159 = vrot.lane.b32.xlu0 %v114, 48
  %v160 = vpop.permute.xlu0 %159
  %161 = vrot.lane.b32.xlu0 %v115, 48
  %v162 = vpop.permute.xlu0 %161
  %163 = vrot.lane.b32.xlu0 %v116, 48
  %v164 = vpop.permute.xlu0 %163
  %165 = vrot.lane.b32.xlu0 %v117, 48
  %v166 = vpop.permute.xlu0 %165
  %167 = vrot.lane.b32.xlu0 %v118, 48
  %v168 = vpop.permute.xlu0 %167
  %vm169 = vcmask 392192
  %v170 = vsel %vm169, %v158, %v160
  %v171 = vsel %vm169, %v160, %v162
  %v172 = vsel %vm169, %v164, %v166
  %v173 = vsel %vm169, %v166, %v168
  %v180 = vsel %vm169, 0.0, %v158
  %v181 = vsel %vm169, 0.0, %v164
  %v183 = vlaneseq
  %v184 = vshrl.u32 %v183, 7
  %v185 = vsub.s32 0, %v184
  %v186 = vrot.slane %v150, %v185
  %v187 = vlaneseq
  %v188 = vshrl.u32 %v187, 7
  %v189 = vsub.s32 1, %v188
  %v190 = vrot.slane %v150, %v189
  %v191 = vlaneseq
  %v192 = vshrl.u32 %v191, 7
  %v193 = vsub.s32 2, %v192
  %v194 = vrot.slane %v150, %v193
  %v198 = vmul.f32 %v186, %v180
  %v199 = vmul.f32 %v190, %v170
  %v200 = vmul.f32 %v194, %v171
  %v201 = vmul.f32 %v186, %v181
  %v202 = vmul.f32 %v190, %v172
  %v203 = vmul.f32 %v194, %v173
  %v204 = vadd.f32 %v143, %v198
  %v205 = vadd.f32 %v144, %v199
  %v206 = vadd.f32 %v145, %v200
  %v207 = vadd.f32 %v146, %v201
  %v208 = vadd.f32 %v147, %v202
  %v209 = vadd.f32 %v148, %v203
  %s210 = scalar_lea.vmem %s0, 48
  %v211 = vld [vmem:[%s210] sm:$0xff]
  %v212 = vld [vmem:[%s210 + $0x8] sm:$0xff]
  %v213 = vld [vmem:[%s210 + $0x10] sm:$0xff]
  %v214 = vld [vmem:[%s210 + $0x60] sm:$0xff]
  %v215 = vld [vmem:[%s210 + $0x68] sm:$0xff]
  %v216 = vld [vmem:[%s210 + $0x70] sm:$0xff]
  %v217 = vmul.f32 %v211, %v24
  %v218 = vmul.f32 %v212, %v28
  %v219 = vmul.f32 %v213, %v32
  %v220 = vmul.f32 %v214, %v24
  %v221 = vmul.f32 %v215, %v28
  %v222 = vmul.f32 %v216, %v32
  %v223 = vadd.f32 %v217, %v46
  %v224 = vadd.f32 %v218, %v50
  %v225 = vadd.f32 %v219, %v54
  %v226 = vadd.f32 %v220, %v46
  %v227 = vadd.f32 %v221, %v50
  %v228 = vadd.f32 %v222, %v54
  %v229 = vmax.f32 %v223, 0.0
  %v230 = vmax.f32 %v224, 0.0
  %v231 = vmax.f32 %v225, 0.0
  %v232 = vmax.f32 %v226, 0.0
  %v233 = vmax.f32 %v227, 0.0
  %v234 = vmax.f32 %v228, 0.0
  %s235 = scalar_lea.vmem %s1, 25
  %v236 = vld [vmem:[%s235] ss:$8 sm:$0x7]
  %v238 = vlaneseq
  %v239 = vshrl.u32 %v238, 7
  %v240 = vsub.s32 0, %v239
  %v241 = vrot.slane %v236, %v240
  %v242 = vlaneseq
  %v243 = vshrl.u32 %v242, 7
  %v244 = vsub.s32 1, %v243
  %v245 = vrot.slane %v236, %v244
  %v246 = vlaneseq
  %v247 = vshrl.u32 %v246, 7
  %v248 = vsub.s32 2, %v247
  %v249 = vrot.slane %v236, %v248
  %v253 = vmul.f32 %v241, %v229
  %v254 = vmul.f32 %v245, %v230
  %v255 = vmul.f32 %v249, %v231
  %v256 = vmul.f32 %v241, %v232
  %v257 = vmul.f32 %v245, %v233
  %v258 = vmul.f32 %v249, %v234
  %v259 = vadd.f32 %v204, %v253
  %v260 = vadd.f32 %v205, %v254
  %v261 = vadd.f32 %v206, %v255
  %v262 = vadd.f32 %v207, %v256
  %v263 = vadd.f32 %v208, %v257
  %v264 = vadd.f32 %v209, %v258
  %s265 = scalar_lea.vmem %s1, 3
  %v266 = vld [vmem:[%s265] ss:$8 sm:$0x7]
  %v273 = vrot.slane %v229, 7
  %v274 = vrot.slane %v230, 7
  %v275 = vrot.slane %v231, 7
  %v276 = vrot.slane %v232, 7
  %v277 = vrot.slane %v233, 7
  %v278 = vrot.slane %v234, 7
  %vm285 = vcmask 1040384
  %v286 = vsel %vm285, 0.0, %v273
  %v287 = vsel %vm285, 0.0, %v274
  %v288 = vsel %vm285, 0.0, %v275
  %v289 = vsel %vm285, 0.0, %v276
  %v290 = vsel %vm285, 0.0, %v277
  %v291 = vsel %vm285, 0.0, %v278
  %v293 = vlaneseq
  %v294 = vshrl.u32 %v293, 7
  %v295 = vsub.s32 0, %v294
  %v296 = vrot.slane %v266, %v295
  %v297 = vlaneseq
  %v298 = vshrl.u32 %v297, 7
  %v299 = vsub.s32 1, %v298
  %v300 = vrot.slane %v266, %v299
  %v301 = vlaneseq
  %v302 = vshrl.u32 %v301, 7
  %v303 = vsub.s32 2, %v302
  %v304 = vrot.slane %v266, %v303
  %v308 = vmul.f32 %v296, %v286
  %v309 = vmul.f32 %v300, %v287
  %v310 = vmul.f32 %v304, %v288
  %v311 = vmul.f32 %v296, %v289
  %v312 = vmul.f32 %v300, %v290
  %v313 = vmul.f32 %v304, %v291
  %v314 = vadd.f32 %v259, %v308
  %v315 = vadd.f32 %v260, %v309
  %v316 = vadd.f32 %v261, %v310
  %v317 = vadd.f32 %v262, %v311
  %v318 = vadd.f32 %v263, %v312
  %v319 = vadd.f32 %v264, %v313
  %s320 = scalar_lea.vmem %s0, 72
  %v321 = vld [vmem:[%s320] sm:$0xff]
  %v322 = vld [vmem:[%s320 + $0x8] sm:$0xff]
  %v323 = vld [vmem:[%s320 + $0x10] sm:$0xff]
  %v324 = vld [vmem:[%s320 + $0x60] sm:$0xff]
  %v325 = vld [vmem:[%s320 + $0x68] sm:$0xff]
  %v326 = vld [vmem:[%s320 + $0x70] sm:$0xff]
  %v327 = vmul.f32 %v321, %v24
  %v328 = vmul.f32 %v322, %v28
  %v329 = vmul.f32 %v323, %v32
  %v330 = vmul.f32 %v324, %v24
  %v331 = vmul.f32 %v325, %v28
  %v332 = vmul.f32 %v326, %v32
  %v333 = vadd.f32 %v327, %v46
  %v334 = vadd.f32 %v328, %v50
  %v335 = vadd.f32 %v329, %v54
  %v336 = vadd.f32 %v330, %v46
  %v337 = vadd.f32 %v331, %v50
  %v338 = vadd.f32 %v332, %v54
  %v339 = vmax.f32 %v333, 0.0
  %v340 = vmax.f32 %v334, 0.0
  %v341 = vmax.f32 %v335, 0.0
  %v342 = vmax.f32 %v336, 0.0
  %v343 = vmax.f32 %v337, 0.0
  %v344 = vmax.f32 %v338, 0.0
  %s345 = scalar_lea.vmem %s1, 26
  %v346 = vld [vmem:[%s345] ss:$8 sm:$0x7]
  %v348 = vlaneseq
  %v349 = vshrl.u32 %v348, 7
  %v350 = vsub.s32 0, %v349
  %v351 = vrot.slane %v346, %v350
  %v352 = vlaneseq
  %v353 = vshrl.u32 %v352, 7
  %v354 = vsub.s32 1, %v353
  %v355 = vrot.slane %v346, %v354
  %v356 = vlaneseq
  %v357 = vshrl.u32 %v356, 7
  %v358 = vsub.s32 2, %v357
  %v359 = vrot.slane %v346, %v358
  %v363 = vmul.f32 %v351, %v339
  %v364 = vmul.f32 %v355, %v340
  %v365 = vmul.f32 %v359, %v341
  %v366 = vmul.f32 %v351, %v342
  %v367 = vmul.f32 %v355, %v343
  %v368 = vmul.f32 %v359, %v344
  %v369 = vadd.f32 %v314, %v363
  %v370 = vadd.f32 %v315, %v364
  %v371 = vadd.f32 %v316, %v365
  %v372 = vadd.f32 %v317, %v366
  %v373 = vadd.f32 %v318, %v367
  %v374 = vadd.f32 %v319, %v368
  %381 = vrot.lane.b32.xlu0 %v339, 48
  %v382 = vpop.permute.xlu0 %381
  %383 = vrot.lane.b32.xlu0 %v340, 48
  %v384 = vpop.permute.xlu0 %383
  %385 = vrot.lane.b32.xlu0 %v341, 48
  %v386 = vpop.permute.xlu0 %385
  %387 = vrot.lane.b32.xlu0 %v342, 48
  %v388 = vpop.permute.xlu0 %387
  %389 = vrot.lane.b32.xlu0 %v343, 48
  %v390 = vpop.permute.xlu0 %389
  %391 = vrot.lane.b32.xlu0 %v344, 48
  %v392 = vpop.permute.xlu0 %391
  %v393 = vsel %vm169, %v382, %v384
  %v394 = vsel %vm169, %v384, %v386
  %v395 = vsel %vm169, %v388, %v390
  %v396 = vsel %vm169, %v390, %v392
  %v403 = vsel %vm169, 0.0, %v382
  %v404 = vsel %vm169, 0.0, %v388
  %s405 = scalar_lea.vmem %s1, 24
  %v406 = vld [vmem:[%s405] ss:$8 sm:$0x7]
  %v408 = vlaneseq
  %v409 = vshrl.u32 %v408, 7
  %v410 = vsub.s32 0, %v409
  %v411 = vrot.slane %v406, %v410
  %v412 = vlaneseq
  %v413 = vshrl.u32 %v412, 7
  %v414 = vsub.s32 1, %v413
  %v415 = vrot.slane %v406, %v414
  %v416 = vlaneseq
  %v417 = vshrl.u32 %v416, 7
  %v418 = vsub.s32 2, %v417
  %v419 = vrot.slane %v406, %v418
  %v423 = vmul.f32 %v411, %v403
  %v424 = vmul.f32 %v415, %v393
  %v425 = vmul.f32 %v419, %v394
  %v426 = vmul.f32 %v411, %v404
  %v427 = vmul.f32 %v415, %v395
  %v428 = vmul.f32 %v419, %v396
  %v429 = vadd.f32 %v369, %v423
  %v430 = vadd.f32 %v370, %v424
  %v431 = vadd.f32 %v371, %v425
  %v432 = vadd.f32 %v372, %v426
  %v433 = vadd.f32 %v373, %v427
  %v434 = vadd.f32 %v374, %v428
  %s435 = scalar_lea.vmem %s1, 4
  %v436 = vld [vmem:[%s435] ss:$8 sm:$0x7]
  %v437 = vrot.slane %v339, 7
  %v438 = vrot.slane %v340, 7
  %v439 = vrot.slane %v341, 7
  %v440 = vrot.slane %v342, 7
  %v441 = vrot.slane %v343, 7
  %v442 = vrot.slane %v344, 7
  %v449 = vsel %vm285, 0.0, %v437
  %v450 = vsel %vm285, 0.0, %v438
  %v451 = vsel %vm285, 0.0, %v439
  %v452 = vsel %vm285, 0.0, %v440
  %v453 = vsel %vm285, 0.0, %v441
  %v454 = vsel %vm285, 0.0, %v442
  %v456 = vlaneseq
  %v457 = vshrl.u32 %v456, 7
  %v458 = vsub.s32 0, %v457
  %v459 = vrot.slane %v436, %v458
  %v460 = vlaneseq
  %v461 = vshrl.u32 %v460, 7
  %v462 = vsub.s32 1, %v461
  %v463 = vrot.slane %v436, %v462
  %v464 = vlaneseq
  %v465 = vshrl.u32 %v464, 7
  %v466 = vsub.s32 2, %v465
  %v467 = vrot.slane %v436, %v466
  %v471 = vmul.f32 %v459, %v449
  %v472 = vmul.f32 %v463, %v450
  %v473 = vmul.f32 %v467, %v451
  %v474 = vmul.f32 %v459, %v452
  %v475 = vmul.f32 %v463, %v453
  %v476 = vmul.f32 %v467, %v454
  %v477 = vadd.f32 %v429, %v471
  %v478 = vadd.f32 %v430, %v472
  %v479 = vadd.f32 %v431, %v473
  %v480 = vadd.f32 %v432, %v474
  %v481 = vadd.f32 %v433, %v475
  %v482 = vadd.f32 %v434, %v476
  %s483 = scalar_lea.vmem %s1, 2
  %v484 = vld [vmem:[%s483] ss:$8 sm:$0x7]
  %v487 = vrot.slane %v403, 7
  %v488 = vrot.slane %v393, 7
  %v489 = vrot.slane %v394, 7
  %v490 = vrot.slane %v404, 7
  %v491 = vrot.slane %v395, 7
  %v492 = vrot.slane %v396, 7
  %v499 = vsel %vm285, 0.0, %v487
  %v500 = vsel %vm285, 0.0, %v488
  %v501 = vsel %vm285, 0.0, %v489
  %v502 = vsel %vm285, 0.0, %v490
  %v503 = vsel %vm285, 0.0, %v491
  %v504 = vsel %vm285, 0.0, %v492
  %v506 = vlaneseq
  %v507 = vshrl.u32 %v506, 7
  %v508 = vsub.s32 0, %v507
  %v509 = vrot.slane %v484, %v508
  %v510 = vlaneseq
  %v511 = vshrl.u32 %v510, 7
  %v512 = vsub.s32 1, %v511
  %v513 = vrot.slane %v484, %v512
  %v514 = vlaneseq
  %v515 = vshrl.u32 %v514, 7
  %v516 = vsub.s32 2, %v515
  %v517 = vrot.slane %v484, %v516
  %v521 = vmul.f32 %v509, %v499
  %v522 = vmul.f32 %v513, %v500
  %v523 = vmul.f32 %v517, %v501
  %v524 = vmul.f32 %v509, %v502
  %v525 = vmul.f32 %v513, %v503
  %v526 = vmul.f32 %v517, %v504
  %v527 = vadd.f32 %v477, %v521
  %v528 = vadd.f32 %v478, %v522
  %v529 = vadd.f32 %v479, %v523
  %v530 = vadd.f32 %v480, %v524
  %v531 = vadd.f32 %v481, %v525
  %v532 = vadd.f32 %v482, %v526
  %s533 = scalar_lea.vmem %s1, 27
  %v534 = vld [vmem:[%s533] ss:$8 sm:$0x7]
  %v536 = vlaneseq
  %v537 = vshrl.u32 %v536, 7
  %v538 = vsub.s32 0, %v537
  %v539 = vrot.slane %v534, %v538
  %v540 = vlaneseq
  %v541 = vshrl.u32 %v540, 7
  %v542 = vsub.s32 1, %v541
  %v543 = vrot.slane %v534, %v542
  %v544 = vlaneseq
  %v545 = vshrl.u32 %v544, 7
  %v546 = vsub.s32 2, %v545
  %v547 = vrot.slane %v534, %v546
  %v551 = vadd.f32 %v527, %v539
  %v552 = vadd.f32 %v528, %v543
  %v553 = vadd.f32 %v529, %v547
  %v554 = vadd.f32 %v530, %v539
  %v555 = vadd.f32 %v531, %v543
  %v556 = vadd.f32 %v532, %v547
  %557 = vst [vmem:[%s2] sm:$0xff] %v551
  %558 = vst [vmem:[%s2 + $0x8] sm:$0xff] %v552
  %559 = vst [vmem:[%s2 + $0x10] sm:$0xff] %v553
  %560 = vst [vmem:[%s2 + $0x18] sm:$0xff] %v554
  %561 = vst [vmem:[%s2 + $0x20] sm:$0xff] %v555
  %562 = vst [vmem:[%s2 + $0x28] sm:$0xff] %v556
  // Predicated region
  $region10: #{module_forward.1} parent=0 // pred_check
    _
  $region11: #{module_forward.1} parent=0 // pred_check_branch
    %564 = sbr.rel (0) target = $region13
  $region12: #{module_forward.1} parent=0 // pred_region
    _
  $region13: #{module_forward.1} parent=0 // pred_fallthru
    _
  // Predicated region
  $region14: #{module_forward.1} parent=0 // pred_check
    _
  $region15: #{module_forward.1} parent=0 // pred_check_branch
    %566 = sbr.rel (0) target = $region17
  $region16: #{module_forward.1} parent=0 // pred_region
    _
  $region17: #{module_forward.1} parent=0 // pred_fallthru
    _

</llo_original>
